<compile_context>
chip_gen: v6e
topology: v6e:2x2x1
jax: 0.10.0
libtpu: 0.0.40
codegen_flags: <defaults>
</compile_context>

<pallas_src>
import functools

import jax
import jax.numpy as jnp
from jax.experimental import pallas as pl
from jax.experimental.pallas import tpu as pltpu


# ----------------------------------------------------------------------------
# helpers
# ----------------------------------------------------------------------------
def _round_up(x: int, m: int) -> int:
    return (x + m - 1) // m * m


def _vmem_limit_bytes() -> int:
    """Generation-aware scoped-VMEM limit (v5e/v6e: 128 MiB, v7x: 64 MiB)."""
    cap = 64 * 1024 * 1024
    try:
        info = pltpu.get_tpu_info()
        cap = int(getattr(info, "vmem_capacity_bytes", cap))
    except Exception:
        pass
    # ~75% of physical VMEM, capped at 100 MiB; never below 32 MiB.
    return max(32 * 1024 * 1024, min((cap * 3) // 4, 100 * 1024 * 1024))


def _pick_tile_m(bs: int, f: int) -> int:
    """Rows per grid step.

    Target ~4 MiB of f32 x per tile (double-buffered ~8 MiB live) so per-step
    DMA dwarfs the ~0.35 us fixed grid overhead, while keeping grid_m >= 2
    (ideally >= 8) so v7x's two TensorCores both get rows.
    """
    bytes_per_row = 4 * max(f, 1)
    tm = (4 * 1024 * 1024) // bytes_per_row
    tm = max(8, (tm // 8) * 8)
    rows = _round_up(bs, 8)
    min_grid = 8 if rows >= 64 else 2
    cap = max(8, (rows // min_grid // 8) * 8)
    if rows >= 16:
        tm = min(tm, cap)
    return max(8, min(tm, rows))


def _affine_bin_params(bin_values):
    """If the bin table is affine in the index (w[k] = w0 + slope*k), return
    (w0, slope) so the kernel can use one fma instead of a select chain."""
    if bin_values is None or len(bin_values) < 2:
        return None
    w0 = float(bin_values[0])
    slope = float(bin_values[1]) - w0
    for k, v in enumerate(bin_values):
        if abs(float(v) - (w0 + slope * k)) > 1e-6 * max(1.0, abs(float(v))):
            return None
    return (w0, slope)


# ----------------------------------------------------------------------------
# Kernel 1 (training path): fused  pred = x @ w + b ;  partial weighted loss
# ----------------------------------------------------------------------------
def _fused_decode_loss_kernel(x_ref, w_ref, b_ref, lab_ref, part_ref, *,
                              l1_alpha, inv_interval, bin_values, bin_affine,
                              n_valid_rows, tile_m, out_scale):
    # f32 MXU matmul (weights are VMEM-resident; kernel is HBM-bound on x).
    pred = jnp.dot(x_ref[...], w_ref[...],
                   preferred_element_type=jnp.float32) + b_ref[...]   # (tm,P)
    lab = lab_ref[...]                                                 # (tm,P)

    # Ragged last tile: rows beyond the true batch*seq contain garbage reads.
    # Zero BOTH diff and the weights for them (0*NaN would otherwise poison).
    row = (jax.lax.broadcasted_iota(jnp.int32, (tile_m, 1), 0)
           + pl.program_id(0) * tile_m)
    valid = row < n_valid_rows                                         # (tm,1)
    diff = jnp.where(valid, pred - lab, jnp.float32(0.0))

    if bin_values is not None:
        n_bins = len(bin_values)
        # trunc-toward-zero cast == torch .long()
        idx = jnp.clip((lab * inv_interval).astype(jnp.int32), 0, n_bins - 1)
        if bin_affine is not None:
            w0, slope = bin_affine
            wv = jnp.float32(w0) + jnp.float32(slope) * idx.astype(jnp.float32)
        else:
            wv = jnp.full(diff.shape, bin_values[n_bins - 1], dtype=jnp.float32)
            for k in range(n_bins - 2, -1, -1):
                wv = jnp.where(idx == k, jnp.float32(bin_values[k]), wv)
        wv = jnp.where(valid, wv, jnp.float32(0.0))
    else:
        wv = jnp.broadcast_to(valid.astype(jnp.float32), diff.shape)

    # Single fused reduction (L2 + alpha * L1).
    partial = jnp.sum(wv * (diff * diff + l1_alpha * jnp.abs(diff)))
    # Pre-scaled scalar broadcast into a lane-dense (1,8,128) block; the host
    # epilogue is then a plain jnp.sum over the whole partials array.
    part_ref[...] = jnp.broadcast_to(partial * out_scale, part_ref.shape)


def fused_decode_and_loss(x2d, label2d, w, b, *, l1_alpha, interval,
                          bin_values):
    """x2d:(BS,F) f32, label2d:(BS,P) f32, w:(F,P) f32, b:(1,P) f32 -> ()."""
    bs, f = x2d.shape
    p = w.shape[1]
    tm = _pick_tile_m(bs, f)
    grid_m = pl.cdiv(bs, tm)

    # TODO(synk): n_valid_rows is a trace-time constant; scalar-prefetch it if
    # batch shapes vary a lot to avoid recompiles.
    kernel = functools.partial(
        _fused_decode_loss_kernel,
        l1_alpha=float(l1_alpha),
        inv_interval=(1.0 / float(interval)) if interval is not None else 0.0,
        bin_values=bin_values,
        bin_affine=_affine_bin_params(bin_values),
        n_valid_rows=bs,
        tile_m=tm,
        out_scale=1.0 / float(bs * p * 8 * 128),
    )

    cost = pl.CostEstimate(
        flops=int(2 * bs * f * p + 10 * bs * p),
        transcendentals=0,
        bytes_accessed=int(4 * bs * f + 4 * bs * p + 4 * f * p + 4 * p
                           + 4 * grid_m * 8 * 128),
    )

    partials = pl.pallas_call(
        kernel,
        out_shape=jax.ShapeDtypeStruct((grid_m, 8, 128), jnp.float32),
        grid=(grid_m,),
        in_specs=[
            pl.BlockSpec((tm, f), lambda i: (i, 0)),     # x rows
            pl.BlockSpec((f, p), lambda i: (0, 0)),      # weights (resident)
            pl.BlockSpec((1, p), lambda i: (0, 0)),      # bias (resident)
            pl.BlockSpec((tm, p), lambda i: (i, 0)),     # labels rows
        ],
        out_specs=pl.BlockSpec((1, 8, 128), lambda i: (i, 0, 0)),
        compiler_params=pltpu.CompilerParams(
            dimension_semantics=("parallel",),           # megacore shard on v7x
            vmem_limit_bytes=_vmem_limit_bytes(),
        ),
        cost_estimate=cost,
    )(x2d.astype(jnp.float32), w, b, label2d.astype(jnp.float32))

    # out_scale already folded mean and the 8*128 broadcast replication.
    return jnp.sum(partials)


# ----------------------------------------------------------------------------
# Kernel 2 (inference path): row-tiled linear decoder, unpadded output
# ----------------------------------------------------------------------------
def _linear_fwd_kernel(x_ref, w_ref, b_ref, o_ref):
    o_ref[...] = (jnp.dot(x_ref[...], w_ref[...],
                          preferred_element_type=jnp.float32)
                  + b_ref[...]).astype(o_ref.dtype)


def linear_forward(x2d, w, b):
    """x2d:(BS,F) f32, w:(F,P) f32, b:(1,P) f32 -> (BS,P) f32."""
    bs, f = x2d.shape
    p = w.shape[1]
    tm = _pick_tile_m(bs, f)
    grid_m = pl.cdiv(bs, tm)

    # TODO(synk): if feature_dim * priv_size grows to tens of MiB, add a K (or
    # N) grid axis marked "arbitrary" with an f32 VMEM accumulator instead of
    # keeping (F,P) resident (fits v6e's 128 MiB but could blow v7x's 64 MiB).
    return pl.pallas_call(
        _linear_fwd_kernel,
        out_shape=jax.ShapeDtypeStruct((bs, p), jnp.float32),
        grid=(grid_m,),
        in_specs=[
            pl.BlockSpec((tm, f), lambda i: (i, 0)),
            pl.BlockSpec((f, p), lambda i: (0, 0)),
            pl.BlockSpec((1, p), lambda i: (0, 0)),
        ],
        out_specs=pl.BlockSpec((tm, p), lambda i: (i, 0)),
        compiler_params=pltpu.CompilerParams(
            dimension_semantics=("parallel",),
            vmem_limit_bytes=_vmem_limit_bytes(),
        ),
    )(x2d.astype(jnp.float32), w, b)


# ----------------------------------------------------------------------------
# Python-side module mirroring `Base`
# ----------------------------------------------------------------------------
class BasePallas:
    def __init__(self, config):
        self.output_type = config.get("output_type")
        self.l1_alpha = config.get("l1_alpha", 0.2)
        self.interval = config["label_weighting_bin_interval"]
        lw = config["label_weights"]
        if lw is not None:
            # Static host-side bin table baked into the kernel as constants.
            self.bin_values = tuple(float(v) for v in jax.device_get(jnp.asarray(lw)))
        else:
            self.bin_values = None
        self.feature_dim = config["feature_dim"]
        self.priv_size = config["priv_size"]
        self._init_params(config.get("seed", 0))

    def _init_params(self, seed):
        # kaiming_normal_ (fan_in, leaky_relu a=0): std = sqrt(2 / fan_in); bias = 0.
        key = jax.random.PRNGKey(seed)
        std = (2.0 / self.feature_dim) ** 0.5
        self.w = (jax.random.normal(key, (self.feature_dim, self.priv_size),
                                    dtype=jnp.float32) * std)   # stored (F,P)
        self.b = jnp.zeros((1, self.priv_size), dtype=jnp.float32)

    # TODO(synk): ModelFactory.create_model(config) is not provided; a single
    # Linear layer stands in for the decoder.
    def forward(self, x):
        """x: (B, S, F) f32 -> (B, S, P) f32."""
        b, s, f = x.shape
        out = linear_forward(x.reshape(b * s, f), self.w, self.b)
        return out.reshape(b, s, self.priv_size)

    def _normalize(self, label, is_training):
        # TODO(synk): decoder.normalize() semantics are decoder-specific; identity here.
        del is_training
        return label

    def forward_and_get_loss(self, x, label, is_training):
        b, s, f = x.shape
        if s != label.shape[1]:
            raise ValueError(
                "The output and label should have the same sequence length.")
        normalized_label = self._normalize(label, is_training)
        # TODO(synk): the reference indexes the bin table with the raw label; with the
        # identity normalize() that equals the normalized label, so one tensor is passed.
        use_bins = self.bin_values is not None and self.interval is not None
        return fused_decode_and_loss(
            x.reshape(b * s, f),
            normalized_label.reshape(b * s, self.priv_size),
            self.w,
            self.b,
            l1_alpha=self.l1_alpha,
            interval=self.interval,
            bin_values=self.bin_values if use_bins else None,
        )


# ----------------------------------------------------------------------------
if __name__ == "__main__":
    B, S, F, P = 2, 8, 32, 4

    label_weights = jnp.array(
        [1.0, 0.9, 0.8, 0.7, 0.6, 0.5, 0.4, 0.3, 0.2, 0.1], dtype=jnp.float32)
    config = {
        "output_type": "synthetic",
        "l1_alpha": 0.2,
        "device": "tpu",
        "label_weights": label_weights,
        "label_weighting_bin_interval": 0.25,
        "feature_dim": F,
        "priv_size": P,
        "seed": 0,
    }

    model = BasePallas(config)

    def ref_loss_fn(x, label):
        x2d = x.reshape(-1, F)
        lab2d = label.reshape(-1, P)
        ref_pred = x2d @ model.w + model.b
        idx = jnp.clip((lab2d / config["label_weighting_bin_interval"]).astype(jnp.int32),
                       0, label_weights.shape[0] - 1)
        wv = label_weights[idx]
        d = ref_pred - lab2d
        return ref_pred, (jnp.mean(wv * d * d)
                          + config["l1_alpha"] * jnp.mean(wv * jnp.abs(d)))

    key = jax.random.PRNGKey(0)
    kx, kl = jax.random.split(key)

    # --- case 1: rows divide the tile evenly -------------------------------
    x = jax.random.normal(kx, (B, S, F), dtype=jnp.float32)
    label = jax.random.uniform(kl, (B, S, P), dtype=jnp.float32,
                               minval=0.0, maxval=2.0)

    pred = model.forward(x)
    loss = model.forward_and_get_loss(x, label, is_training=True)
    jax.block_until_ready(pred)
    jax.block_until_ready(loss)
    assert pred.shape == (B, S, P)
    assert loss.shape == ()

    ref_pred, ref_loss = ref_loss_fn(x, label)
    assert jnp.allclose(pred.reshape(-1, P), ref_pred, rtol=2e-2, atol=2e-2), \
        "forward mismatch vs reference"
    assert jnp.allclose(loss, ref_loss, rtol=2e-2, atol=2e-2), \
        "loss mismatch vs reference"

    # --- case 2: ragged last tile (exercises the in-kernel valid mask) ------
    B2, S2 = 3, 5                                    # 15 rows -> tm=8, grid=2
    kx2, kl2 = jax.random.split(jax.random.PRNGKey(1))
    x2 = jax.random.normal(kx2, (B2, S2, F), dtype=jnp.float32)
    label2 = jax.random.uniform(kl2, (B2, S2, P), dtype=jnp.float32,
                                minval=0.0, maxval=2.0)
    pred2 = model.forward(x2)
    loss2 = model.forward_and_get_loss(x2, label2, is_training=True)
    jax.block_until_ready(pred2)
    jax.block_until_ready(loss2)
    ref_pred2, ref_loss2 = ref_loss_fn(x2, label2)
    assert jnp.allclose(pred2.reshape(-1, P), ref_pred2, rtol=2e-2, atol=2e-2), \
        "ragged forward mismatch vs reference"
    assert jnp.allclose(loss2, ref_loss2, rtol=2e-2, atol=2e-2), \
        "ragged loss mismatch vs reference"

    print("KERNEL_OK")
</pallas_src>

<mosaic_0001>
module attributes {stable_mosaic.version = 11 : i64} {
  func.func @_linear_fwd_kernel(%arg0: i32, %arg1: memref<8x32xf32, #tpu.memory_space<vmem>>, %arg2: memref<32x4xf32, #tpu.memory_space<vmem>>, %arg3: memref<1x4xf32, #tpu.memory_space<vmem>>, %arg4: memref<8x4xf32, #tpu.memory_space<vmem>>) attributes {dimension_semantics = [#tpu.dimension_semantics<parallel>], iteration_bounds = array<i64: 2>, scalar_prefetch = 0 : i64, scratch_operands = 0 : i64, tpu.core_type = #tpu.core_type<tc>, window_params = [{transform_indices = @transform_0, window_bounds = array<i64: 8, 32>}, {pipeline_mode = #tpu.pipeline_mode<synchronous>, transform_indices = @transform_1, window_bounds = array<i64: 32, 4>}, {pipeline_mode = #tpu.pipeline_mode<synchronous>, transform_indices = @transform_2, window_bounds = array<i64: 1, 4>}, {transform_indices = @transform_3, window_bounds = array<i64: 8, 4>}]} {
    %c0 = arith.constant 0 : index
    %c0_0 = arith.constant 0 : index
    %0 = vector.load %arg1[%c0, %c0_0] : memref<8x32xf32, #tpu.memory_space<vmem>>, vector<8x32xf32>
    %c0_1 = arith.constant 0 : index
    %c0_2 = arith.constant 0 : index
    %1 = vector.load %arg2[%c0_1, %c0_2] : memref<32x4xf32, #tpu.memory_space<vmem>>, vector<32x4xf32>
    %cst = arith.constant dense<0.000000e+00> : vector<8x4xf32>
    %2 = tpu.matmul %0, %1, %cst {dimension_numbers = #tpu.dot_dimension_numbers<[1], [0], [0], [1], [0, 0, 1, 1], [], []>} : vector<8x32xf32>, vector<32x4xf32>, vector<8x4xf32> -> vector<8x4xf32>
    %c0_3 = arith.constant 0 : index
    %c0_4 = arith.constant 0 : index
    %3 = vector.load %arg3[%c0_3, %c0_4] : memref<1x4xf32, #tpu.memory_space<vmem>>, vector<1x4xf32>
    %4 = vector.broadcast %3 : vector<1x4xf32> to vector<8x4xf32>
    %5 = arith.addf %2, %4 : vector<8x4xf32>
    %c0_5 = arith.constant 0 : index
    %c0_6 = arith.constant 0 : index
    %6 = vector.load %arg4[%c0_5, %c0_6] : memref<8x4xf32, #tpu.memory_space<vmem>>, vector<8x4xf32>
    tpu.vector_store %arg4[%c0_5, %c0_6], %5 {strides = array<i32>} : memref<8x4xf32, #tpu.memory_space<vmem>>, vector<8x4xf32>,
    return
  }
  func.func @transform_0(%arg0: i32) -> (i32, i32) {
    %c0_i32 = arith.constant 0 : i32
    %c0_i32_0 = arith.constant 0 : i32
    return %arg0, %c0_i32 : i32, i32
  }
  func.func @transform_1(%arg0: i32) -> (i32, i32) {
    %c0_i32 = arith.constant 0 : i32
    %c0_i32_0 = arith.constant 0 : i32
    %c0_i32_1 = arith.constant 0 : i32
    return %c0_i32, %c0_i32_0 : i32, i32
  }
  func.func @transform_2(%arg0: i32) -> (i32, i32) {
    %c0_i32 = arith.constant 0 : i32
    %c0_i32_0 = arith.constant 0 : i32
    %c0_i32_1 = arith.constant 0 : i32
    return %c0_i32, %c0_i32_0 : i32, i32
  }
  func.func @transform_3(%arg0: i32) -> (i32, i32) {
    %c0_i32 = arith.constant 0 : i32
    %c0_i32_0 = arith.constant 0 : i32
    return %arg0, %c0_i32 : i32, i32
  }
}

</mosaic_0001>

<llo_original>
// kernel: tpu_custom_call.1
$region0: #{tpu_custom_call.1}
  #allocation0 [shape = 'u32[]', space=smem, size = 0x4, offset = 0x4, fixed_abs, tag = 'smem constant byte address 0x4 - core index']
  #allocation1 [shape = 'u32[144,128]{1,0:T(1,128)}', space=vmem, size = 0x12000, scoped, tag = 'internal scratch']
  %s0 = inlined_call_operand.vmem [shape: f32[16,32], index: 0, kind: input, shape index: {}]
  %s1 = inlined_call_operand.vmem [shape: f32[32,4], index: 1, kind: input, shape index: {}]
  %s2 = inlined_call_operand.vmem [shape: f32[1,4], index: 2, kind: input, shape index: {}]
  %s3 = inlined_call_operand.vmem [shape: f32[16,4], index: 3, kind: output, shape index: {}]
  %s4 = sld [smem:[#allocation0]]
  $region45: #{tpu_custom_call.1} parent=0
    _
  %s6 = ssub.s32 1, %s4
  %s7 = scalar_select 0, %s6, %s4
  loop: start=0, step=1, limit=4
  $region2: #{tpu_custom_call.1} parent=0 // loop_pre_header
    _
  $region3: #{tpu_custom_call.1} parent=0 // loop_header
    %s9 = sphi 0, %s13
    %p10 = scmp.ge.s32.totalorder %s9, 4
    %s19 = sphi 0, %s21
    %s22 = sphi 0, %s19
    %s23 = sphi 0, %s22
    %s39 = sphi 0, %s23
    %s43 = sphi 0, %s43
    %s45 = sphi 0, %s43
    %s46 = sphi 0, %s45
    %s60 = sphi 0, %s46
    %s64 = sphi 0, %s64
    %s66 = sphi 0, %s64
    %s67 = sphi 0, %s66
    %s81 = sphi 0, %s67
    %s87 = sphi 0, %s89
    %s90 = sphi 0, %s87
    %s91 = sphi 0, %s90
    %s107 = sphi 0, %s91
  $region4: #{tpu_custom_call.1} parent=0 // loop_header_branch
    %12 = sbr.rel (%p10) target = $region8
  $region5: #{tpu_custom_call.1} parent=0 // loop_body
    %s14 = ssub.s32 %s9, 1
    %s15 = ssub.s32 %s9, 2
    %s16 = sadd.s32 %s9, 1
    %s17 = ssub.s32 %s9, %s16
    %p18 = scmp.eq.s32.totalorder %s17, 0
    %s20 = sadd.s32 %s19, 1
    %s21 = scalar_select %p18, %s19, %s20
    %p24 = pneg %p18
    %p25 = scmp.eq.s32.totalorder %s9, 1
    %p26 = por %p24, %p25
    %p27 = scmp.ne.s32.totalorder %s19, %s22
    %p28 = scmp.eq.s32.totalorder %s9, 0
    %p29 = por %p27, %p28
    %p30 = scmp.ne.s32.totalorder %s19, %s22
    %p31 = scmp.eq.s32.totalorder %s14, 1
    %p32 = por %p30, %p31
    %p33 = scmp.ne.s32.totalorder %s22, %s23
    %p34 = scmp.eq.s32.totalorder %s14, 0
    %p35 = por %p33, %p34
    %p36 = scmp.ne.s32.totalorder %s22, %s23
    %p37 = scmp.eq.s32.totalorder %s15, 1
    %p38 = por %p36, %p37
    %p40 = scmp.ne.s32.totalorder %s23, %s39
    %p41 = scmp.eq.s32.totalorder %s15, 0
    %p42 = por %p40, %p41
    %s44 = sadd.s32 %s43, 1
    %p47 = scmp.eq.s32.totalorder %s9, 1
    %p48 = scmp.ne.s32.totalorder %s43, %s45
    %p49 = scmp.eq.s32.totalorder %s9, 0
    %p50 = por %p48, %p49
    %p51 = scmp.ne.s32.totalorder %s43, %s45
    %p52 = scmp.eq.s32.totalorder %s14, 1
    %p53 = por %p51, %p52
    %p54 = scmp.ne.s32.totalorder %s45, %s46
    %p55 = scmp.eq.s32.totalorder %s14, 0
    %p56 = por %p54, %p55
    %p57 = scmp.ne.s32.totalorder %s45, %s46
    %p58 = scmp.eq.s32.totalorder %s15, 1
    %p59 = por %p57, %p58
    %p61 = scmp.ne.s32.totalorder %s46, %s60
    %p62 = scmp.eq.s32.totalorder %s15, 0
    %p63 = por %p61, %p62
    %s65 = sadd.s32 %s64, 1
    %p68 = scmp.eq.s32.totalorder %s9, 1
    %p69 = scmp.ne.s32.totalorder %s64, %s66
    %p70 = scmp.eq.s32.totalorder %s9, 0
    %p71 = por %p69, %p70
    %p72 = scmp.ne.s32.totalorder %s64, %s66
    %p73 = scmp.eq.s32.totalorder %s14, 1
    %p74 = por %p72, %p73
    %p75 = scmp.ne.s32.totalorder %s66, %s67
    %p76 = scmp.eq.s32.totalorder %s14, 0
    %p77 = por %p75, %p76
    %p78 = scmp.ne.s32.totalorder %s66, %s67
    %p79 = scmp.eq.s32.totalorder %s15, 1
    %p80 = por %p78, %p79
    %p82 = scmp.ne.s32.totalorder %s67, %s81
    %p83 = scmp.eq.s32.totalorder %s15, 0
    %p84 = por %p82, %p83
    %s85 = ssub.s32 %s9, %s16
    %p86 = scmp.eq.s32.totalorder %s85, 0
    %s88 = sadd.s32 %s87, 1
    %s89 = scalar_select %p86, %s87, %s88
    %p92 = pneg %p86
    %p93 = scmp.eq.s32.totalorder %s9, 1
    %p94 = por %p92, %p93
    %p95 = scmp.ne.s32.totalorder %s87, %s90
    %p96 = scmp.eq.s32.totalorder %s9, 0
    %p97 = por %p95, %p96
    %p98 = scmp.ne.s32.totalorder %s87, %s90
    %p99 = scmp.eq.s32.totalorder %s14, 1
    %p100 = por %p98, %p99
    %p101 = scmp.ne.s32.totalorder %s90, %s91
    %p102 = scmp.eq.s32.totalorder %s14, 0
    %p103 = por %p101, %p102
    %p104 = scmp.ne.s32.totalorder %s90, %s91
    %p105 = scmp.eq.s32.totalorder %s15, 1
    %p106 = por %p104, %p105
    %p108 = scmp.ne.s32.totalorder %s91, %s107
    %p109 = scmp.eq.s32.totalorder %s15, 0
    %p110 = por %p108, %p109
    %p111 = scmp.le.s32.totalorder 1, %s9
    %p112 = scmp.lt.s32.totalorder %s9, 3
    %p113 = pnand %p111, %p112
    %p114 = pneg %p113
    // Predicated region
    $region9: #{tpu_custom_call.1} parent=5 // pred_check
      _
    $region10: #{tpu_custom_call.1} parent=5 // pred_check_branch
      %116 = sbr.rel (%p113) target = $region12
    $region11: #{tpu_custom_call.1} parent=5 // pred_region
      %s117 = ssub.s32 %s9, 1
      // Predicated region
      $region13: #{tpu_custom_call.1} parent=11 // pred_check
        %p118 = pneg %p56
      $region14: #{tpu_custom_call.1} parent=11 // pred_check_branch
        %120 = sbr.rel (%p118) target = $region16
      $region15: #{tpu_custom_call.1} parent=11 // pred_region
        _
      $region16: #{tpu_custom_call.1} parent=11 // pred_fallthru
        _
      // Predicated region
      $region17: #{tpu_custom_call.1} parent=11 // pred_check
        %p121 = pneg %p77
      $region18: #{tpu_custom_call.1} parent=11 // pred_check_branch
        %123 = sbr.rel (%p121) target = $region20
      $region19: #{tpu_custom_call.1} parent=11 // pred_region
        _
      $region20: #{tpu_custom_call.1} parent=11 // pred_fallthru
        _
    $region12: #{tpu_custom_call.1} parent=5 // pred_fallthru
      _
    %p124 = scmp.lt.s32.totalorder %s9, 2
    // Predicated region
    $region21: #{tpu_custom_call.1} parent=5 // pred_check
      %p125 = pneg %p124
    $region22: #{tpu_custom_call.1} parent=5 // pred_check_branch
      %127 = sbr.rel (%p125) target = $region24
    $region23: #{tpu_custom_call.1} parent=5 // pred_region
      // Predicated region
      $region25: #{tpu_custom_call.1} parent=23 // pred_check
        %p128 = pneg %p29
      $region26: #{tpu_custom_call.1} parent=23 // pred_check_branch
        %130 = sbr.rel (%p128) target = $region28
      $region27: #{tpu_custom_call.1} parent=23 // pred_region
        %p131 = scmp.lt.s32.totalorder %s9, 1
        %s132 = scalar_select %p131, %s9, 1
        %s133 = smul.addr %s132, 8
        %s134 = scalar_lea.vmem %s0, %s133
      $region28: #{tpu_custom_call.1} parent=23 // pred_fallthru
        _
    $region24: #{tpu_custom_call.1} parent=5 // pred_fallthru
      _
    %p135 = scmp.le.s32.totalorder 1, %s9
    %p136 = scmp.lt.s32.totalorder %s9, 3
    %p137 = pnand %p135, %p136
    %p138 = pneg %p137
    // Predicated region
    $region29: #{tpu_custom_call.1} parent=5 // pred_check
      _
    $region30: #{tpu_custom_call.1} parent=5 // pred_check_branch
      %140 = sbr.rel (%p137) target = $region32
    $region31: #{tpu_custom_call.1} parent=5 // pred_region
      %s141 = ssub.s32 %s9, 1
      %p142 = scmp.lt.s32.totalorder %s14, 1
      %s143 = scalar_select %p142, %s14, 1
      %s144 = smul.addr %s143, 8
      %s145 = scalar_lea.vmem %s0, %s144
      %p146 = pneg %p35
      %p147 = pneg %p32
      %p148 = pneg %p56
      %p149 = pneg %p53
      %p150 = pneg %p77
      %p151 = pneg %p74
      %p152 = pneg %p103
      %p153 = pneg %p100
      %p154 = scmp.lt.s32.totalorder %s14, 1
      %s155 = scalar_select %p154, %s14, 1
      %s156 = smul.addr %s155, 8
      %s157 = scalar_lea.vmem %s3, %s156
      %p158 = scmp.lt.s32.totalorder %s14, 1
      %s159 = scalar_select %p158, %s14, 1
      %s160 = smul.addr %s159, 8
      %s161 = scalar_lea.vmem %s0, %s160
      %p162 = scmp.lt.s32.totalorder %s14, 1
      %s163 = scalar_select %p162, %s14, 1
      %s164 = smul.addr %s163, 8
      %s165 = scalar_lea.vmem %s3, %s164
      %v166 = vld [vmem:[%s161] sm:$0xff]
      %v167 = vld [vmem:[%s1] sm:$0xff]
      %v168 = vld [vmem:[%s1 + $0x8] sm:$0xff]
      %v169 = vld [vmem:[%s1 + $0x10] sm:$0xff]
      %v170 = vld [vmem:[%s1 + $0x18] sm:$0xff]
      %v171 = vld [vmem:[%s2] sm:$0x1]
      %v173 = vlaneseq
      %v174 = vshrl.u32 %v173, 7
      %v175 = vsub.s32 0, %v174
      %v176 = vrot.slane %v171, %v175
      %vm178 = vcmask 261120
      %v180 = vsel %vm178, %v166, 0
      %182 = vmatprep.subr.mxu0 0.0
      %183 = vmatpush1.msra.mxu0 0.0
      %184 = vmatprep.subr.mxu0 0.0
      %185 = vmatpush1.msra.mxu0 0.0
      %186 = vmatprep.subr.mxu0 0.0
      %187 = vmatpush1.msra.mxu0 0.0
      %188 = vmatprep.subr.mxu0 0.0
      %189 = vmatpush1.msra.mxu0 0.0
      %190 = vmatprep.subr.mxu0 0.0
      %191 = vmatpush1.msra.mxu0 0.0
      %192 = vmatprep.subr.mxu0 0.0
      %193 = vmatpush1.msra.mxu0 0.0
      %194 = vmatprep.subr.mxu0 0.0
      %195 = vmatpush1.msra.mxu0 0.0
      %196 = vmatprep.subr.mxu0 0.0
      %197 = vmatpush1.msra.mxu0 0.0
      %198 = vmatprep.subr.mxu0 0.0
      %199 = vmatpush1.msra.mxu0 0.0
      %200 = vmatprep.subr.mxu0 0.0
      %201 = vmatpush1.msra.mxu0 0.0
      %202 = vmatprep.subr.mxu0 0.0
      %203 = vmatpush1.msra.mxu0 0.0
      %204 = vmatprep.subr.mxu0 0.0
      %205 = vmatpush1.msra.mxu0 0.0
      %206 = vmatprep.subr.mxu0 0.0
      %207 = vmatpush1.msra.mxu0 %v170
      %208 = vmatprep.subr.mxu0 0.0
      %209 = vmatpush1.msra.mxu0 %v169
      %210 = vmatprep.subr.mxu0 0.0
      %211 = vmatpush1.msra.mxu0 %v168
      %212 = vmatprep.subr.mxu0 0.0
      %213 = vmatpush1.msra.mxu0 %v167
      %214 = vmatprep.subr.mxu0 0.0
      %215 = vmatpush2.msra.mxu0 0.0
      %216 = vmatprep.subr.mxu0 0.0
      %217 = vmatpush2.msra.mxu0 0.0
      %218 = vmatprep.subr.mxu0 0.0
      %219 = vmatpush2.msra.mxu0 0.0
      %220 = vmatprep.subr.mxu0 0.0
      %221 = vmatpush2.msra.mxu0 0.0
      %222 = vmatprep.subr.mxu0 0.0
      %223 = vmatpush2.msra.mxu0 0.0
      %224 = vmatprep.subr.mxu0 0.0
      %225 = vmatpush2.msra.mxu0 0.0
      %226 = vmatprep.subr.mxu0 0.0
      %227 = vmatpush2.msra.mxu0 0.0
      %228 = vmatprep.subr.mxu0 0.0
      %229 = vmatpush2.msra.mxu0 0.0
      %230 = vmatprep.subr.mxu0 0.0
      %231 = vmatpush2.msra.mxu0 0.0
      %232 = vmatprep.subr.mxu0 0.0
      %233 = vmatpush2.msra.mxu0 0.0
      %234 = vmatprep.subr.mxu0 0.0
      %235 = vmatpush2.msra.mxu0 0.0
      %236 = vmatprep.subr.mxu0 0.0
      %237 = vmatpush2.msra.mxu0 0.0
      %238 = vmatprep.subr.mxu0 0.0
      %239 = vmatpush2.msra.mxu0 0.0
      %240 = vmatprep.subr.mxu0 0.0
      %241 = vmatpush2.msra.mxu0 0.0
      %242 = vmatprep.subr.mxu0 0.0
      %243 = vmatpush2.msra.mxu0 0.0
      %244 = vmatprep.subr.mxu0 0.0
      %245 = vmatpush2.msra.mxu0 0.0
      %246 = vmatprep.mubr.f32.mxu0 0.0
      %247 = vmatmul.mubr.f32.gmra.mxu0 %v180
      %v248 = vpop.f32.mrf.mxu0
      %v249 = vadd.f32 %v176, %v248
      %v250 = vpop.f32.mrf.mxu0
      %251 = vdwg.mxu0
      %vm252 = vcmask 31744
      %253 = vst.msk [vmem:[%s165] sm:$0xff] %vm252, %v249
      %p254 = scmp.lt.s32.totalorder %s14, 1
      %s255 = scalar_select %p254, %s14, 1
      %s256 = smul.addr %s255, 8
      %s257 = scalar_lea.vmem %s3, %s256
      // Predicated region
      $region33: #{tpu_custom_call.1} parent=31 // pred_check
        %p258 = pneg %p100
      $region34: #{tpu_custom_call.1} parent=31 // pred_check_branch
        %260 = sbr.rel (%p258) target = $region36
      $region35: #{tpu_custom_call.1} parent=31 // pred_region
        _
      $region36: #{tpu_custom_call.1} parent=31 // pred_fallthru
        _
    $region32: #{tpu_custom_call.1} parent=5 // pred_fallthru
      _
    %p261 = scmp.le.s32.totalorder 2, %s9
    // Predicated region
    $region37: #{tpu_custom_call.1} parent=5 // pred_check
      %p262 = pneg %p261
    $region38: #{tpu_custom_call.1} parent=5 // pred_check_branch
      %264 = sbr.rel (%p262) target = $region40
    $region39: #{tpu_custom_call.1} parent=5 // pred_region
      %s265 = ssub.s32 %s9, 2
      // Predicated region
      $region41: #{tpu_custom_call.1} parent=39 // pred_check
        %p266 = pneg %p106
      $region42: #{tpu_custom_call.1} parent=39 // pred_check_branch
        %268 = sbr.rel (%p266) target = $region44
      $region43: #{tpu_custom_call.1} parent=39 // pred_region
        %p269 = scmp.lt.s32.totalorder %s15, 1
        %s270 = scalar_select %p269, %s15, 1
        %s271 = smul.addr %s270, 8
        %s272 = scalar_lea.vmem %s3, %s271
      $region44: #{tpu_custom_call.1} parent=39 // pred_fallthru
        _
    $region40: #{tpu_custom_call.1} parent=5 // pred_fallthru
      _
  $region6: #{tpu_custom_call.1} parent=0 // loop_footer
    %s13 = sadd.s32 1, %s9
  $region7: #{tpu_custom_call.1} parent=0 // loop_footer_branch
    %8 = sbr.rel target = $region3
  $region8: #{tpu_custom_call.1} parent=0 // loop_exit
    _

</llo_original>
